<compile_context>
chip_gen: v6e
topology: v6e:2x2x1
jax: 0.10.0
libtpu: 0.0.40
codegen_flags: <defaults>
</compile_context>

<pallas_src>
import functools

import jax
import jax.numpy as jnp
from jax.experimental import pallas as pl
from jax.experimental.pallas import tpu as pltpu

_LANE = 128          # TPU lane width
_MAX_TILE_N = 1024   # lane-dense tile size cap (per grid step)


def _linear_kernel(w_ref, b_ref, xt_ref, ot_ref):
    """One lane-dense tile of the transposed problem.

    w_ref : (1, 2) f32 in SMEM   -- nn.Linear weight (out, in)
    b_ref : (1,)   f32 in SMEM   -- nn.Linear bias
    xt_ref: (2, TILE_N) f32 VMEM -- x transposed, batch on the lane axis
    ot_ref: (1, TILE_N) f32 VMEM -- output transposed
    """
    w0 = w_ref[0, 0]
    w1 = w_ref[0, 1]
    b = b_ref[0]
    x0 = xt_ref[0:1, :]          # (1, TILE_N)
    x1 = xt_ref[1:2, :]          # (1, TILE_N)
    # Pure VPU multiply-adds; scalar weights broadcast across the lanes.
    ot_ref[...] = x0 * w0 + x1 * w1 + b


@functools.partial(jax.jit, static_argnames=("max_tile_n",))
def linear_forward(x, weight, bias, *, max_tile_n=_MAX_TILE_N):
    """x: (N, 2) f32, weight: (1, 2) f32, bias: (1,) f32 -> (N, 1) f32."""
    n, in_f = x.shape
    out_f, w_in = weight.shape
    assert in_f == 2 and w_in == 2 and out_f == 1, "kernel specialized to Linear(2, 1)"

    # Lane-dense tiling: tile is a multiple of 128, capped at max_tile_n.
    tile_n = min(max_tile_n, pl.cdiv(n, _LANE) * _LANE)
    n_pad = pl.cdiv(n, tile_n) * tile_n

    # Transpose so batch sits on the 128-lane axis; pad batch to the grid.
    x_t = jnp.pad(x.T, ((0, 0), (0, n_pad - n)))          # (2, n_pad)

    grid = (n_pad // tile_n,)

    out_t = pl.pallas_call(
        _linear_kernel,
        out_shape=jax.ShapeDtypeStruct((out_f, n_pad), x.dtype),
        grid=grid,
        in_specs=[
            # 3 parameter scalars -> SMEM (no padded VMEM tiles, no extra DMA)
            pl.BlockSpec(memory_space=pltpu.MemorySpace.SMEM),   # weight (1, 2)
            pl.BlockSpec(memory_space=pltpu.MemorySpace.SMEM),   # bias (1,)
            # activations: lane-dense (2, tile_n) blocks over the batch axis
            pl.BlockSpec((in_f, tile_n), lambda i: (0, i)),
        ],
        out_specs=pl.BlockSpec((out_f, tile_n), lambda i: (0, i)),
        compiler_params=pltpu.CompilerParams(
            dimension_semantics=("parallel",),   # shard batch tiles across TCs (v7x)
        ),
    )(weight, bias, x_t)

    # Back to the PyTorch layout (N, out_features), dropping the pad.
    return out_t[:, :n].T


if __name__ == "__main__":
    key = jax.random.PRNGKey(0)
    k_x, k_w, k_b, k_x2 = jax.random.split(key, 4)

    in_features, out_features = 2, 1

    # Deterministic synthetic parameters (matching nn.Linear(2, 1) shapes).
    weight = jax.random.normal(k_w, (out_features, in_features), dtype=jnp.float32) * 0.5
    bias = jax.random.normal(k_b, (out_features,), dtype=jnp.float32) * 0.1

    # Small test shape consistent with the module's forward.
    batch = 8
    x = jax.random.normal(k_x, (batch, in_features), dtype=jnp.float32)

    out = linear_forward(x, weight, bias)
    jax.block_until_ready(out)
    ref = x @ weight.T + bias
    assert out.shape == (batch, out_features)
    assert jnp.allclose(out, ref, atol=1e-5), "mismatch vs reference (small batch)"

    # Also exercise the multi-tile grid path (2 lane-dense tiles of 1024).
    big_batch = 2048
    x_big = jax.random.normal(k_x2, (big_batch, in_features), dtype=jnp.float32)
    out_big = linear_forward(x_big, weight, bias)
    jax.block_until_ready(out_big)
    ref_big = x_big @ weight.T + bias
    assert out_big.shape == (big_batch, out_features)
    assert jnp.allclose(out_big, ref_big, atol=1e-5), "mismatch vs reference (large batch)"

    print("KERNEL_OK")
</pallas_src>

<mosaic_0001>
module attributes {stable_mosaic.version = 11 : i64} {
  func.func @_linear_kernel(%arg0: i32, %arg1: memref<1x2xf32, #tpu.memory_space<smem>>, %arg2: memref<1xf32, #tpu.memory_space<smem>>, %arg3: memref<2x128xf32, #tpu.memory_space<vmem>>, %arg4: memref<1x128xf32, #tpu.memory_space<vmem>>) attributes {dimension_semantics = [#tpu.dimension_semantics<parallel>], iteration_bounds = array<i64: 1>, scalar_prefetch = 0 : i64, scratch_operands = 0 : i64, tpu.core_type = #tpu.core_type<tc>, window_params = [{transform_indices = @transform_0, window_bounds = array<i64: 1, 2>}, {transform_indices = @transform_1, window_bounds = array<i64: 1>}, {transform_indices = @transform_2, window_bounds = array<i64: 2, 128>}, {transform_indices = @transform_3, window_bounds = array<i64: 1, 128>}]} {
    %c0 = arith.constant 0 : index
    %c0_0 = arith.constant 0 : index
    %0 = memref.load %arg1[%c0, %c0_0] : memref<1x2xf32, #tpu.memory_space<smem>>
    %c0_1 = arith.constant 0 : index
    %c1 = arith.constant 1 : index
    %1 = memref.load %arg1[%c0_1, %c1] : memref<1x2xf32, #tpu.memory_space<smem>>
    %c0_2 = arith.constant 0 : index
    %2 = memref.load %arg2[%c0_2] : memref<1xf32, #tpu.memory_space<smem>>
    %c0_3 = arith.constant 0 : index
    %c0_4 = arith.constant 0 : index
    %3 = vector.load %arg3[%c0_3, %c0_4] : memref<2x128xf32, #tpu.memory_space<vmem>>, vector<1x128xf32>
    %c1_5 = arith.constant 1 : index
    %c0_6 = arith.constant 0 : index
    %4 = vector.load %arg3[%c1_5, %c0_6] : memref<2x128xf32, #tpu.memory_space<vmem>>, vector<1x128xf32>
    %5 = vector.broadcast %0 : f32 to vector<1x128xf32>
    %6 = arith.mulf %3, %5 : vector<1x128xf32>
    %7 = vector.broadcast %1 : f32 to vector<1x128xf32>
    %8 = arith.mulf %4, %7 : vector<1x128xf32>
    %9 = arith.addf %6, %8 : vector<1x128xf32>
    %10 = vector.broadcast %2 : f32 to vector<1x128xf32>
    %11 = arith.addf %9, %10 : vector<1x128xf32>
    %c0_7 = arith.constant 0 : index
    %c0_8 = arith.constant 0 : index
    %12 = vector.load %arg4[%c0_7, %c0_8] : memref<1x128xf32, #tpu.memory_space<vmem>>, vector<1x128xf32>
    tpu.vector_store %arg4[%c0_7, %c0_8], %11 {strides = array<i32>} : memref<1x128xf32, #tpu.memory_space<vmem>>, vector<1x128xf32>,
    return
  }
  func.func @transform_0(%arg0: i32) -> (i32, i32) {
    %c0_i32 = arith.constant 0 : i32
    %c0_i32_0 = arith.constant 0 : i32
    %c0_i32_1 = arith.constant 0 : i32
    return %c0_i32, %c0_i32_0 : i32, i32
  }
  func.func @transform_1(%arg0: i32) -> i32 {
    %c0_i32 = arith.constant 0 : i32
    %c0_i32_0 = arith.constant 0 : i32
    return %c0_i32 : i32
  }
  func.func @transform_2(%arg0: i32) -> (i32, i32) {
    %c0_i32 = arith.constant 0 : i32
    %c0_i32_0 = arith.constant 0 : i32
    return %c0_i32, %arg0 : i32, i32
  }
  func.func @transform_3(%arg0: i32) -> (i32, i32) {
    %c0_i32 = arith.constant 0 : i32
    %c0_i32_0 = arith.constant 0 : i32
    return %c0_i32, %arg0 : i32, i32
  }
}

</mosaic_0001>

<llo_original>
// kernel: linear_forward.1
$region0: #{linear_forward.1}
  #allocation0 [shape = 'u32[]', space=smem, size = 0x4, offset = 0x4, fixed_abs, tag = 'smem constant byte address 0x4 - core index']
  #allocation1 [shape = 'u32[144,128]{1,0:T(1,128)}', space=vmem, size = 0x12000, scoped, tag = 'internal scratch']
  #allocation2 [shape = 'f32[1]{0:T(128)S(6)}', space=smem, size = 0x200, scoped, tag = 'scoped memory for linear_forward.1']
  %s0 = inlined_call_operand.vmem [shape: f32[1,2], index: 0, kind: input, shape index: {}]
  %s1 = inlined_call_operand.<no memory space> [shape: f32[1], index: 1, kind: input, shape index: {}]
  %s2 = inlined_call_operand.vmem [shape: f32[2,128], index: 2, kind: input, shape index: {}]
  %s3 = inlined_call_operand.vmem [shape: f32[1,128], index: 3, kind: output, shape index: {}]
  %s4 = sld [smem:[#allocation0]]
  $region26: #{linear_forward.1} parent=0
    _
  %s6 = ssub.s32 1, %s4
  %s7 = scalar_select 0, %s6, %s4
  %8 = sst [smem:[#allocation2]] %s1
  $region1: #{linear_forward.1} parent=0
    #allocation3 [shape = 'u8[512]{0}', space=smem, size = 0x200, scoped, tag = 'input window, operand 0, single buffered']
    #allocation4 [shape = 's32[1]{0}', space=sflag, size = 0x4, scoped, tag = 'scoped memory for linear_forward.1']
    %9 = vsyncpa [#allocation4], 0
    // Predicated region
    $region2: #{linear_forward.1} parent=1 // pred_check
      _
    $region3: #{linear_forward.1} parent=1 // pred_check_branch
      %11 = sbr.rel (0) target = $region5
    $region4: #{linear_forward.1} parent=1 // pred_region
      %s13 = ssub.s32 16, 16
      %14 = vsyncadd [#allocation4], %s13
      %s16 = sshll.u32 %s0, 4
      %s17 = int_to_ptr.vmem [resolvable:$true] %s16
      %19 = dma.vmem_to_smem %s17, 16, [#allocation3], [#allocation4]
    $region5: #{linear_forward.1} parent=1 // pred_fallthru
      _
    // Predicated region
    $region6: #{linear_forward.1} parent=1 // pred_check
      _
    $region7: #{linear_forward.1} parent=1 // pred_check_branch
      %21 = sbr.rel (0) target = $region9
    $region8: #{linear_forward.1} parent=1 // pred_region
      _
    $region9: #{linear_forward.1} parent=1 // pred_fallthru
      _
    // Predicated region
    $region10: #{linear_forward.1} parent=1 // pred_check
      _
    $region11: #{linear_forward.1} parent=1 // pred_check_branch
      %23 = sbr.rel (0) target = $region13
    $region12: #{linear_forward.1} parent=1 // pred_region
      _
    $region13: #{linear_forward.1} parent=1 // pred_fallthru
      _
    // Predicated region
    $region14: #{linear_forward.1} parent=1 // pred_check
      _
    $region15: #{linear_forward.1} parent=1 // pred_check_branch
      %25 = sbr.rel (0) target = $region17
    $region16: #{linear_forward.1} parent=1 // pred_region
      %26 = dma.done [#allocation4], 16
    $region17: #{linear_forward.1} parent=1 // pred_fallthru
      _
    %27 = sfence
    %s28 = sld [smem:[#allocation3]]
    %s29 = sld [smem:[#allocation3 + $0x1]]
    %s30 = sld [smem:[#allocation2]]
    %v31 = vld [vmem:[%s2] sm:$0x1]
    %v32 = vld [vmem:[%s2 + $0x1] sm:$0x1]
    %v33 = vstv %s28
    %v34 = vmul.f32 %v31, %v33
    %v35 = vstv %s29
    %v36 = vmul.f32 %v32, %v35
    %v37 = vadd.f32 %v34, %v36
    %v38 = vstv %s30
    %v39 = vadd.f32 %v37, %v38
    %40 = vst [vmem:[%s3] sm:$0x1] %v39
    // Predicated region
    $region18: #{linear_forward.1} parent=1 // pred_check
      _
    $region19: #{linear_forward.1} parent=1 // pred_check_branch
      %42 = sbr.rel (0) target = $region21
    $region20: #{linear_forward.1} parent=1 // pred_region
      _
    $region21: #{linear_forward.1} parent=1 // pred_fallthru
      _
    // Predicated region
    $region22: #{linear_forward.1} parent=1 // pred_check
      _
    $region23: #{linear_forward.1} parent=1 // pred_check_branch
      %44 = sbr.rel (0) target = $region25
    $region24: #{linear_forward.1} parent=1 // pred_region
      _
    $region25: #{linear_forward.1} parent=1 // pred_fallthru
      _
    %45 = vsyncpa [#allocation4], 1

</llo_original>
